<compile_context>
chip_gen: v7x
topology: tpu7x:2x2x1
jax: 0.10.0
libtpu: 0.0.40
codegen_flags: <defaults>
</compile_context>

<pallas_src>
import math
import functools

import jax
import jax.numpy as jnp
from jax.experimental import pallas as pl
from jax.experimental.pallas import tpu as pltpu


_SQRT_2_OVER_PI = math.sqrt(2.0 / math.pi)


def _gelu_tanh(x):
    # matches the PyTorch reference gelu() (tanh approximation)
    return 0.5 * x * (1.0 + jnp.tanh(_SQRT_2_OVER_PI * (x + 0.044715 * x * x * x)))


def _round_up(x, m):
    return ((x + m - 1) // m) * m


def _hw_defaults():
    """(resident-path tm, chunked-path tm, vmem_limit_bytes, bf16 VPU/EUP available)."""
    try:
        kind = jax.devices()[0].device_kind.lower()
    except Exception:
        kind = ""
    if "v2" in kind or "v3" in kind:
        return 128, 128, None, False
    if "v4" in kind:
        return 128, 256, 64 * 1024 * 1024, False
    if "v5" in kind:
        # NOTE: lumps v5p with v5e; wrong detection only degrades perf.
        return 256, 256, 100 * 1024 * 1024, False
    if "v6" in kind:
        return 256, 512, 100 * 1024 * 1024, True
    if "7" in kind:
        return 256, 640, 56 * 1024 * 1024, True
    return 128, 256, None, False


# ---------------------------------------------------------------------------
# Kernels
# ---------------------------------------------------------------------------

def _epilogue(x_f32, y_f32, b2_ref, gamma_ref, beta_ref, o_ref, eps):
    # Dropout is identity in eval mode.
    # TODO(synk): training-mode dropout (pltpu.prng_random_bits mask) not implemented.
    z = x_f32 + y_f32 + b2_ref[...].astype(jnp.float32)      # residual + dense2 bias
    mean = jnp.mean(z, axis=-1, keepdims=True)
    zc = z - mean
    var = jnp.mean(zc * zc, axis=-1, keepdims=True)
    inv = jax.lax.rsqrt(var + eps)
    out = (zc * inv * gamma_ref[...].astype(jnp.float32)
           + beta_ref[...].astype(jnp.float32))
    o_ref[...] = out.astype(o_ref.dtype)


def ffn_kernel_resident(x_ref, w1_ref, b1_ref, w2_ref, b2_ref, gamma_ref, beta_ref,
                        o_ref, *, eps, act_dtype):
    # x_ref: (tm, H) token tile; w1_ref: (H, F); w2_ref: (F, H) -- VMEM resident.
    x = x_ref[...]
    h = jnp.dot(x, w1_ref[...], preferred_element_type=act_dtype)
    h = _gelu_tanh(h + b1_ref[...].astype(act_dtype))
    y = jnp.dot(h.astype(w2_ref.dtype), w2_ref[...],
                preferred_element_type=jnp.float32)
    _epilogue(x.astype(jnp.float32), y, b2_ref, gamma_ref, beta_ref, o_ref, eps)


def ffn_kernel_chunked(x_ref, w1_ref, b1_ref, w2_ref, b2_ref, gamma_ref, beta_ref,
                       o_ref, acc_ref, *, eps, act_dtype):
    # F is chunked on grid axis 1; dense2 partials accumulate in an f32 VMEM scratch.
    f = pl.program_id(1)
    x = x_ref[...]
    h = jnp.dot(x, w1_ref[...], preferred_element_type=act_dtype)
    h = _gelu_tanh(h + b1_ref[...].astype(act_dtype))
    y_part = jnp.dot(h.astype(w2_ref.dtype), w2_ref[...],
                     preferred_element_type=jnp.float32)

    @pl.when(f == 0)
    def _first():               # direct store: no separate zero-init pass
        acc_ref[...] = y_part

    @pl.when(f > 0)
    def _accumulate():
        acc_ref[...] += y_part

    @pl.when(f == pl.num_programs(1) - 1)
    def _finalize():
        _epilogue(x.astype(jnp.float32), acc_ref[...],
                  b2_ref, gamma_ref, beta_ref, o_ref, eps)


# ---------------------------------------------------------------------------
# Wrapper
# ---------------------------------------------------------------------------

def _pick_tf(F, H, tm, itemsize, budget):
    """Largest lane-aligned (x128) divisor of F whose per-step footprint fits VMEM."""
    def step_bytes(tf):
        return (4 * H * tf * itemsize          # w1/w2 chunks, double-buffered
                + 4 * tm * H * itemsize        # x + out tiles, double-buffered
                + 2 * (tf + 3 * H) * itemsize  # biases / gamma / beta
                + tm * H * 4                   # f32 accumulator scratch
                + tm * tf * 4                  # gelu intermediate (worst case f32)
                + 2 * tm * H * 4)              # f32 epilogue temps
    for cand in sorted((d for d in range(128, F, 128) if F % d == 0), reverse=True):
        if step_bytes(cand) <= budget:
            return cand
    # TODO(synk): no lane-aligned divisor of F fits the VMEM budget; fall back to
    # full-F blocks (compile-time VMEM risk only for pathological F on v7x).
    return F


def bert_ffn(hidden_states, params, *, tm=None, tf=None, eps=1e-5,
             compute_dtype=None):
    """hidden_states: [B, S, H]; params dict with w1, b1, w2, b2, gamma, beta.

    f32 inputs take the precise (multi-pass MXU) path by default; pass
    compute_dtype=jnp.bfloat16 for MXU-native matmuls with f32 accumulation.
    """
    B, S, H = hidden_states.shape
    F = params["w1"].shape[1]
    M = B * S
    out_dtype = hidden_states.dtype

    tm_res_def, tm_chunk_def, vmem_limit, bf16_elem = _hw_defaults()
    budget = int(0.85 * (vmem_limit if vmem_limit is not None else 64 * 1024 * 1024))

    x2d = hidden_states.reshape(M, H)
    w1, w2 = params["w1"], params["w2"]
    if compute_dtype is not None and jnp.dtype(compute_dtype) != x2d.dtype:
        # Cast once in HBM (halves weight DMA too); epilogue stays f32 in-kernel.
        x2d = x2d.astype(compute_dtype)
        w1 = w1.astype(compute_dtype)
        w2 = w2.astype(compute_dtype)

    op_dtype = x2d.dtype
    itemsize = jnp.dtype(op_dtype).itemsize
    # gelu / bias-add dtype: bf16 only where the VPU/EUP support bf16 (v6e/v7x).
    act_dtype = jnp.bfloat16 if (bf16_elem and op_dtype == jnp.bfloat16) else jnp.float32

    # Row tiles: 16-aligned for packed (sub-32-bit) dtypes, 8-aligned otherwise.
    align = 16 if itemsize < 4 else 8

    def _clamp_tm(t):
        t = min(t, _round_up(M, align))
        return _round_up(max(t, align), align)

    w_bytes = (w1.size + w2.size) * itemsize

    # --- choose resident-weight vs. F-chunked path -----------------------------
    tm_resident = _clamp_tm(tm if tm is not None else tm_res_def)
    resident_bytes = (w_bytes                              # single-buffered weights
                      + 4 * tm_resident * H * itemsize     # x + out, double-buffered
                      + 2 * (F + 3 * H) * itemsize         # biases / gamma / beta
                      + tm_resident * F * 4                # gelu intermediate
                      + 3 * tm_resident * H * 4)           # f32 epilogue temps

    user_tf_valid = (tf is not None and 0 < tf < F and F % tf == 0
                     and (tf % 128 == 0 or tf == F))
    use_resident = (not user_tf_valid) and (resident_bytes <= budget)

    # --- common operands --------------------------------------------------------
    b1 = params["b1"].reshape(1, F)
    b2 = params["b2"].reshape(1, H)
    gamma = params["gamma"].reshape(1, H)
    beta = params["beta"].reshape(1, H)

    if use_resident:
        tm_eff = tm_resident
        M_pad = _round_up(M, tm_eff)
        n_row = M_pad // tm_eff
        if M_pad != M:
            x2d = jnp.pad(x2d, ((0, M_pad - M), (0, 0)))

        io_bytes = 2 * M_pad * H * itemsize
        cost = pl.CostEstimate(
            flops=int(4 * M_pad * H * F),
            transcendentals=int(M_pad * F),
            bytes_accessed=int(io_bytes + w_bytes),          # weights read once
        )
        out = pl.pallas_call(
            functools.partial(ffn_kernel_resident, eps=eps, act_dtype=act_dtype),
            out_shape=jax.ShapeDtypeStruct((M_pad, H), out_dtype),
            grid_spec=pltpu.PrefetchScalarGridSpec(
                num_scalar_prefetch=0,
                grid=(n_row,),
                in_specs=[
                    pl.BlockSpec((tm_eff, H), lambda i: (i, 0)),     # x tile
                    # constant-index weights: single-buffered so the useless
                    # second copy does not eat v7x's 64 MiB VMEM.
                    pl.BlockSpec((H, F), lambda i: (0, 0),
                                 pipeline_mode=pl.Buffered(1)),      # w1 resident
                    pl.BlockSpec((1, F), lambda i: (0, 0)),          # b1
                    pl.BlockSpec((F, H), lambda i: (0, 0),
                                 pipeline_mode=pl.Buffered(1)),      # w2 resident
                    pl.BlockSpec((1, H), lambda i: (0, 0)),          # b2
                    pl.BlockSpec((1, H), lambda i: (0, 0)),          # gamma
                    pl.BlockSpec((1, H), lambda i: (0, 0)),          # beta
                ],
                out_specs=pl.BlockSpec((tm_eff, H), lambda i: (i, 0)),
            ),
            compiler_params=pltpu.CompilerParams(
                dimension_semantics=("parallel",),
                vmem_limit_bytes=vmem_limit,
            ),
            cost_estimate=cost,
        )(x2d, w1, b1, w2, b2, gamma, beta)
    else:
        tm_eff = _clamp_tm(tm if tm is not None else tm_chunk_def)
        M_pad = _round_up(M, tm_eff)
        n_row = M_pad // tm_eff
        if M_pad != M:
            x2d = jnp.pad(x2d, ((0, M_pad - M), (0, 0)))

        tf_eff = tf if user_tf_valid else _pick_tf(F, H, tm_eff, itemsize, budget)
        n_f = F // tf_eff

        io_bytes = 2 * M_pad * H * itemsize
        cost = pl.CostEstimate(
            flops=int(4 * M_pad * H * F),
            transcendentals=int(M_pad * F),
            bytes_accessed=int(io_bytes + n_row * w_bytes),  # weights re-streamed
        )
        out = pl.pallas_call(
            functools.partial(ffn_kernel_chunked, eps=eps, act_dtype=act_dtype),
            out_shape=jax.ShapeDtypeStruct((M_pad, H), out_dtype),
            grid_spec=pltpu.PrefetchScalarGridSpec(
                num_scalar_prefetch=0,
                grid=(n_row, n_f),
                in_specs=[
                    pl.BlockSpec((tm_eff, H), lambda i, f: (i, 0)),  # x tile
                    pl.BlockSpec((H, tf_eff), lambda i, f: (0, f)),  # w1 chunk
                    pl.BlockSpec((1, tf_eff), lambda i, f: (0, f)),  # b1 chunk
                    pl.BlockSpec((tf_eff, H), lambda i, f: (f, 0)),  # w2 chunk
                    pl.BlockSpec((1, H), lambda i, f: (0, 0)),       # b2
                    pl.BlockSpec((1, H), lambda i, f: (0, 0)),       # gamma
                    pl.BlockSpec((1, H), lambda i, f: (0, 0)),       # beta
                ],
                out_specs=pl.BlockSpec((tm_eff, H), lambda i, f: (i, 0)),
                scratch_shapes=[pltpu.VMEM((tm_eff, H), jnp.float32)],
            ),
            compiler_params=pltpu.CompilerParams(
                dimension_semantics=("parallel", "arbitrary"),
                vmem_limit_bytes=vmem_limit,
            ),
            cost_estimate=cost,
        )(x2d, w1, b1, w2, b2, gamma, beta)

    return out[:M].reshape(B, S, H)


# ---------------------------------------------------------------------------
# Params / reference / test
# ---------------------------------------------------------------------------

def init_params(key, hidden_size, ffn_hidden_size, dtype=jnp.float32):
    k1, k2 = jax.random.split(key, 2)
    # dense weights stored as (in, out) so the kernel does x @ W directly
    w1 = jax.random.normal(k1, (hidden_size, ffn_hidden_size), dtype) * 0.02
    w2 = jax.random.normal(k2, (ffn_hidden_size, hidden_size), dtype) * 0.02
    b1 = jnp.zeros((ffn_hidden_size,), dtype)
    b2 = jnp.zeros((hidden_size,), dtype)
    gamma = jnp.ones((hidden_size,), dtype)
    beta = jnp.zeros((hidden_size,), dtype)
    return dict(w1=w1, b1=b1, w2=w2, b2=b2, gamma=gamma, beta=beta)


def _reference(hidden_states, params, eps=1e-5):
    x = hidden_states.astype(jnp.float32)
    w1 = params["w1"].astype(jnp.float32)
    w2 = params["w2"].astype(jnp.float32)
    h = _gelu_tanh(x @ w1 + params["b1"].astype(jnp.float32))
    y = h @ w2 + params["b2"].astype(jnp.float32)
    z = x + y
    mean = jnp.mean(z, axis=-1, keepdims=True)
    var = jnp.mean((z - mean) ** 2, axis=-1, keepdims=True)
    return ((z - mean) * jax.lax.rsqrt(var + eps)
            * params["gamma"].astype(jnp.float32)
            + params["beta"].astype(jnp.float32))


if __name__ == "__main__":
    key = jax.random.PRNGKey(0)
    k_x, k_p, k_p2 = jax.random.split(key, 3)

    batch, seq, hidden, ffn = 2, 8, 32, 64
    x = jax.random.normal(k_x, (batch, seq, hidden), jnp.float32)
    params = init_params(k_p, hidden, ffn)
    ref = _reference(x, params)

    # 1) f32 precise path (resident weights, Buffered(1) weight specs).
    out = jax.block_until_ready(bert_ffn(x, params))
    assert out.shape == x.shape
    assert jnp.allclose(out, ref, atol=1e-4, rtol=1e-4), "f32 mismatch vs reference"

    # 2) bf16 operands: MXU-native matmuls, f32 accumulation / f32 LN epilogue.
    x_bf = x.astype(jnp.bfloat16)
    params_bf = {k: v.astype(jnp.bfloat16) for k, v in params.items()}
    out_bf = jax.block_until_ready(bert_ffn(x_bf, params_bf))
    assert out_bf.shape == x.shape
    assert jnp.allclose(out_bf.astype(jnp.float32), ref, atol=1e-1, rtol=1e-1), \
        "bf16 mismatch vs reference"

    # 3) f32 caller requesting bf16 matmuls (compute_dtype fast path).
    out_cd = jax.block_until_ready(bert_ffn(x, params, compute_dtype=jnp.bfloat16))
    assert out_cd.shape == x.shape
    assert jnp.allclose(out_cd, ref, atol=1e-1, rtol=1e-1), \
        "compute_dtype=bf16 mismatch vs reference"

    # 4) F-chunked streaming fallback (forced via tf), larger F.
    ffn2 = 256
    params2 = init_params(k_p2, hidden, ffn2)
    ref2 = _reference(x, params2)
    out2 = jax.block_until_ready(bert_ffn(x, params2, tf=128))
    assert out2.shape == x.shape
    assert jnp.allclose(out2, ref2, atol=1e-4, rtol=1e-4), "chunked-path mismatch"

    print("KERNEL_OK")
</pallas_src>

<mosaic_0001>
module attributes {stable_mosaic.version = 11 : i64} {
  func.func @ffn_kernel_resident(%arg0: i32, %arg1: memref<16x32xf32, #tpu.memory_space<vmem>>, %arg2: memref<32x64xf32, #tpu.memory_space<vmem>>, %arg3: memref<1x64xf32, #tpu.memory_space<vmem>>, %arg4: memref<64x32xf32, #tpu.memory_space<vmem>>, %arg5: memref<1x32xf32, #tpu.memory_space<vmem>>, %arg6: memref<1x32xf32, #tpu.memory_space<vmem>>, %arg7: memref<1x32xf32, #tpu.memory_space<vmem>>, %arg8: memref<16x32xf32, #tpu.memory_space<vmem>>) attributes {dimension_semantics = [#tpu.dimension_semantics<parallel>], iteration_bounds = array<i64: 1>, scalar_prefetch = 0 : i64, scratch_operands = 0 : i64, tpu.core_type = #tpu.core_type<tc>, window_params = [{transform_indices = @transform_0, window_bounds = array<i64: 16, 32>}, {pipeline_mode = #tpu.pipeline_mode<synchronous>, transform_indices = @transform_1, window_bounds = array<i64: 32, 64>}, {pipeline_mode = #tpu.pipeline_mode<synchronous>, transform_indices = @transform_2, window_bounds = array<i64: 1, 64>}, {pipeline_mode = #tpu.pipeline_mode<synchronous>, transform_indices = @transform_3, window_bounds = array<i64: 64, 32>}, {pipeline_mode = #tpu.pipeline_mode<synchronous>, transform_indices = @transform_4, window_bounds = array<i64: 1, 32>}, {pipeline_mode = #tpu.pipeline_mode<synchronous>, transform_indices = @transform_5, window_bounds = array<i64: 1, 32>}, {pipeline_mode = #tpu.pipeline_mode<synchronous>, transform_indices = @transform_6, window_bounds = array<i64: 1, 32>}, {transform_indices = @transform_7, window_bounds = array<i64: 16, 32>}]} {
    %c0 = arith.constant 0 : index
    %c0_0 = arith.constant 0 : index
    %0 = vector.load %arg1[%c0, %c0_0] : memref<16x32xf32, #tpu.memory_space<vmem>>, vector<16x32xf32>
    %c0_1 = arith.constant 0 : index
    %c0_2 = arith.constant 0 : index
    %1 = vector.load %arg2[%c0_1, %c0_2] : memref<32x64xf32, #tpu.memory_space<vmem>>, vector<32x64xf32>
    %cst = arith.constant dense<0.000000e+00> : vector<16x64xf32>
    %2 = tpu.matmul %0, %1, %cst {dimension_numbers = #tpu.dot_dimension_numbers<[1], [0], [0], [1], [0, 0, 1, 1], [], []>} : vector<16x32xf32>, vector<32x64xf32>, vector<16x64xf32> -> vector<16x64xf32>
    %c0_3 = arith.constant 0 : index
    %c0_4 = arith.constant 0 : index
    %3 = vector.load %arg3[%c0_3, %c0_4] : memref<1x64xf32, #tpu.memory_space<vmem>>, vector<1x64xf32>
    %4 = vector.broadcast %3 : vector<1x64xf32> to vector<16x64xf32>
    %5 = arith.addf %2, %4 : vector<16x64xf32>
    %cst_5 = arith.constant 5.000000e-01 : f32
    %6 = vector.broadcast %cst_5 : f32 to vector<16x64xf32>
    %7 = arith.mulf %6, %5 : vector<16x64xf32>
    %cst_6 = arith.constant 4.471500e-02 : f32
    %8 = vector.broadcast %cst_6 : f32 to vector<16x64xf32>
    %9 = arith.mulf %8, %5 : vector<16x64xf32>
    %10 = arith.mulf %9, %5 : vector<16x64xf32>
    %11 = arith.mulf %10, %5 : vector<16x64xf32>
    %12 = arith.addf %5, %11 : vector<16x64xf32>
    %cst_7 = arith.constant 0.797884583 : f32
    %13 = vector.broadcast %cst_7 : f32 to vector<16x64xf32>
    %14 = arith.mulf %13, %12 : vector<16x64xf32>
    %15 = math.tanh %14 : vector<16x64xf32>
    %cst_8 = arith.constant 1.000000e+00 : f32
    %16 = vector.broadcast %cst_8 : f32 to vector<16x64xf32>
    %17 = arith.addf %16, %15 : vector<16x64xf32>
    %18 = arith.mulf %7, %17 : vector<16x64xf32>
    %c0_9 = arith.constant 0 : index
    %c0_10 = arith.constant 0 : index
    %19 = vector.load %arg4[%c0_9, %c0_10] : memref<64x32xf32, #tpu.memory_space<vmem>>, vector<64x32xf32>
    %cst_11 = arith.constant dense<0.000000e+00> : vector<16x32xf32>
    %20 = tpu.matmul %18, %19, %cst_11 {dimension_numbers = #tpu.dot_dimension_numbers<[1], [0], [0], [1], [0, 0, 1, 1], [], []>} : vector<16x64xf32>, vector<64x32xf32>, vector<16x32xf32> -> vector<16x32xf32>
    %21 = arith.addf %0, %20 : vector<16x32xf32>
    %c0_12 = arith.constant 0 : index
    %c0_13 = arith.constant 0 : index
    %22 = vector.load %arg5[%c0_12, %c0_13] : memref<1x32xf32, #tpu.memory_space<vmem>>, vector<1x32xf32>
    %23 = vector.broadcast %22 : vector<1x32xf32> to vector<16x32xf32>
    %24 = arith.addf %21, %23 : vector<16x32xf32>
    %cst_14 = arith.constant dense<0.000000e+00> : vector<16xf32>
    %25 = vector.multi_reduction <add>, %24, %cst_14 [1] : vector<16x32xf32> to vector<16xf32>
    %26 = vector.shape_cast %25 : vector<16xf32> to vector<16x1xf32>
    %cst_15 = arith.constant 3.200000e+01 : f32
    %27 = vector.broadcast %cst_15 : f32 to vector<16x1xf32>
    %28 = arith.divf %26, %27 : vector<16x1xf32>
    %29 = vector.broadcast %28 : vector<16x1xf32> to vector<16x32xf32>
    %30 = arith.subf %24, %29 : vector<16x32xf32>
    %31 = arith.mulf %30, %30 : vector<16x32xf32>
    %cst_16 = arith.constant dense<0.000000e+00> : vector<16xf32>
    %32 = vector.multi_reduction <add>, %31, %cst_16 [1] : vector<16x32xf32> to vector<16xf32>
    %33 = vector.shape_cast %32 : vector<16xf32> to vector<16x1xf32>
    %cst_17 = arith.constant 3.200000e+01 : f32
    %34 = vector.broadcast %cst_17 : f32 to vector<16x1xf32>
    %35 = arith.divf %33, %34 : vector<16x1xf32>
    %cst_18 = arith.constant 9.99999974E-6 : f32
    %36 = vector.broadcast %cst_18 : f32 to vector<16x1xf32>
    %37 = arith.addf %35, %36 : vector<16x1xf32>
    %38 = math.rsqrt %37 : vector<16x1xf32>
    %39 = vector.broadcast %38 : vector<16x1xf32> to vector<16x32xf32>
    %40 = arith.mulf %30, %39 : vector<16x32xf32>
    %c0_19 = arith.constant 0 : index
    %c0_20 = arith.constant 0 : index
    %41 = vector.load %arg6[%c0_19, %c0_20] : memref<1x32xf32, #tpu.memory_space<vmem>>, vector<1x32xf32>
    %42 = vector.broadcast %41 : vector<1x32xf32> to vector<16x32xf32>
    %43 = arith.mulf %40, %42 : vector<16x32xf32>
    %c0_21 = arith.constant 0 : index
    %c0_22 = arith.constant 0 : index
    %44 = vector.load %arg7[%c0_21, %c0_22] : memref<1x32xf32, #tpu.memory_space<vmem>>, vector<1x32xf32>
    %45 = vector.broadcast %44 : vector<1x32xf32> to vector<16x32xf32>
    %46 = arith.addf %43, %45 : vector<16x32xf32>
    %c0_23 = arith.constant 0 : index
    %c0_24 = arith.constant 0 : index
    %47 = vector.load %arg8[%c0_23, %c0_24] : memref<16x32xf32, #tpu.memory_space<vmem>>, vector<16x32xf32>
    tpu.vector_store %arg8[%c0_23, %c0_24], %46 {strides = array<i32>} : memref<16x32xf32, #tpu.memory_space<vmem>>, vector<16x32xf32>,
    return
  }
  func.func @transform_0(%arg0: i32) -> (i32, i32) {
    %c0_i32 = arith.constant 0 : i32
    %c0_i32_0 = arith.constant 0 : i32
    return %arg0, %c0_i32 : i32, i32
  }
  func.func @transform_1(%arg0: i32) -> (i32, i32) {
    %c0_i32 = arith.constant 0 : i32
    %c0_i32_0 = arith.constant 0 : i32
    %c0_i32_1 = arith.constant 0 : i32
    return %c0_i32, %c0_i32_0 : i32, i32
  }
  func.func @transform_2(%arg0: i32) -> (i32, i32) {
    %c0_i32 = arith.constant 0 : i32
    %c0_i32_0 = arith.constant 0 : i32
    %c0_i32_1 = arith.constant 0 : i32
    return %c0_i32, %c0_i32_0 : i32, i32
  }
  func.func @transform_3(%arg0: i32) -> (i32, i32) {
    %c0_i32 = arith.constant 0 : i32
    %c0_i32_0 = arith.constant 0 : i32
    %c0_i32_1 = arith.constant 0 : i32
    return %c0_i32, %c0_i32_0 : i32, i32
  }
  func.func @transform_4(%arg0: i32) -> (i32, i32) {
    %c0_i32 = arith.constant 0 : i32
    %c0_i32_0 = arith.constant 0 : i32
    %c0_i32_1 = arith.constant 0 : i32
    return %c0_i32, %c0_i32_0 : i32, i32
  }
  func.func @transform_5(%arg0: i32) -> (i32, i32) {
    %c0_i32 = arith.constant 0 : i32
    %c0_i32_0 = arith.constant 0 : i32
    %c0_i32_1 = arith.constant 0 : i32
    return %c0_i32, %c0_i32_0 : i32, i32
  }
  func.func @transform_6(%arg0: i32) -> (i32, i32) {
    %c0_i32 = arith.constant 0 : i32
    %c0_i32_0 = arith.constant 0 : i32
    %c0_i32_1 = arith.constant 0 : i32
    return %c0_i32, %c0_i32_0 : i32, i32
  }
  func.func @transform_7(%arg0: i32) -> (i32, i32) {
    %c0_i32 = arith.constant 0 : i32
    %c0_i32_0 = arith.constant 0 : i32
    return %arg0, %c0_i32 : i32, i32
  }
}

</mosaic_0001>

<llo_original>
// kernel: tpu_custom_call.1
$region0: #{tpu_custom_call.1}
  #allocation0 [shape = 'u32[]', space=smem, size = 0x4, offset = 0x4, fixed_abs, tag = 'smem constant byte address 0x4 - core index']
  #allocation1 [shape = 'u32[144,128]{1,0:T(1,128)}', space=vmem, size = 0x12000, scoped, tag = 'internal scratch']
  %s0 = inlined_call_operand.vmem [shape: f32[16,32], index: 0, kind: input, shape index: {}]
  %s1 = inlined_call_operand.vmem [shape: f32[32,64], index: 1, kind: input, shape index: {}]
  %s2 = inlined_call_operand.vmem [shape: f32[1,64], index: 2, kind: input, shape index: {}]
  %s3 = inlined_call_operand.vmem [shape: f32[64,32], index: 3, kind: input, shape index: {}]
  %s4 = inlined_call_operand.vmem [shape: f32[1,32], index: 4, kind: input, shape index: {}]
  %s5 = inlined_call_operand.vmem [shape: f32[1,32], index: 5, kind: input, shape index: {}]
  %s6 = inlined_call_operand.vmem [shape: f32[1,32], index: 6, kind: input, shape index: {}]
  %s7 = inlined_call_operand.hbm [shape: f32[16,32], index: 7, kind: output, shape index: {}]
  %s8 = sld [smem:[#allocation0]]
  $region38: #{tpu_custom_call.1} parent=0
    _
  %s10 = ssub.s32 1, %s8
  %s11 = scalar_select 0, %s10, %s8
  $region1: #{tpu_custom_call.1} parent=0
    #allocation2 [shape = 'u8[8192]{0}', space=vmem, size = 0x2000, scoped, tag = 'output window, operand 0, single buffered']
    #allocation3 [shape = 's32[1]{0}', space=sflag, size = 0x4, scoped, tag = 'scoped memory for tpu_custom_call.1']
    %12 = vsyncpa [#allocation3], 0
    // Predicated region
    $region2: #{tpu_custom_call.1} parent=1 // pred_check
      _
    $region3: #{tpu_custom_call.1} parent=1 // pred_check_branch
      %14 = sbr.rel (0) target = $region5
    $region4: #{tpu_custom_call.1} parent=1 // pred_region
      _
    $region5: #{tpu_custom_call.1} parent=1 // pred_fallthru
      _
    // Predicated region
    $region6: #{tpu_custom_call.1} parent=1 // pred_check
      _
    $region7: #{tpu_custom_call.1} parent=1 // pred_check_branch
      %16 = sbr.rel (0) target = $region9
    $region8: #{tpu_custom_call.1} parent=1 // pred_region
      _
    $region9: #{tpu_custom_call.1} parent=1 // pred_fallthru
      _
    // Predicated region
    $region10: #{tpu_custom_call.1} parent=1 // pred_check
      _
    $region11: #{tpu_custom_call.1} parent=1 // pred_check_branch
      %18 = sbr.rel (0) target = $region13
    $region12: #{tpu_custom_call.1} parent=1 // pred_region
      _
    $region13: #{tpu_custom_call.1} parent=1 // pred_fallthru
      _
    // Predicated region
    $region14: #{tpu_custom_call.1} parent=1 // pred_check
      _
    $region15: #{tpu_custom_call.1} parent=1 // pred_check_branch
      %20 = sbr.rel (0) target = $region17
    $region16: #{tpu_custom_call.1} parent=1 // pred_region
      _
    $region17: #{tpu_custom_call.1} parent=1 // pred_fallthru
      _
    // Predicated region
    $region18: #{tpu_custom_call.1} parent=1 // pred_check
      _
    $region19: #{tpu_custom_call.1} parent=1 // pred_check_branch
      %22 = sbr.rel (0) target = $region21
    $region20: #{tpu_custom_call.1} parent=1 // pred_region
      _
    $region21: #{tpu_custom_call.1} parent=1 // pred_fallthru
      _
    // Predicated region
    $region22: #{tpu_custom_call.1} parent=1 // pred_check
      _
    $region23: #{tpu_custom_call.1} parent=1 // pred_check_branch
      %24 = sbr.rel (0) target = $region25
    $region24: #{tpu_custom_call.1} parent=1 // pred_region
      _
    $region25: #{tpu_custom_call.1} parent=1 // pred_fallthru
      _
    // Predicated region
    $region26: #{tpu_custom_call.1} parent=1 // pred_check
      _
    $region27: #{tpu_custom_call.1} parent=1 // pred_check_branch
      %26 = sbr.rel (0) target = $region29
    $region28: #{tpu_custom_call.1} parent=1 // pred_region
      _
    $region29: #{tpu_custom_call.1} parent=1 // pred_fallthru
      _
    %v27 = vld [vmem:[%s0] sm:$0xff]
    %v28 = vld [vmem:[%s0 + $0x8] sm:$0xff]
    %v29 = vld [vmem:[%s1] sm:$0xff]
    %v30 = vld [vmem:[%s1 + $0x8] sm:$0xff]
    %v31 = vld [vmem:[%s1 + $0x10] sm:$0xff]
    %v32 = vld [vmem:[%s1 + $0x18] sm:$0xff]
    %v33 = vld [vmem:[%s2] sm:$0x1]
    %v35 = vlaneseq
    %v36 = vshrl.u32 %v35, 7
    %v37 = vsub.s32 0, %v36
    %v38 = vrot.slane %v33, %v37
    %vm40 = vcmask 261120
    %v42 = vsel %vm40, %v27, 0
    %v45 = vsel %vm40, %v28, 0
    %47 = vmatprep.subr.mxu0 0.0
    %48 = vmatpush1.msra.mxu0 %v29
    %49 = vmatprep.subr.mxu0 0.0
    %50 = vmatpush1.msra.mxu0 %v30
    %51 = vmatprep.subr.mxu0 0.0
    %52 = vmatpush1.msra.mxu0 %v31
    %53 = vmatprep.subr.mxu0 0.0
    %54 = vmatpush1.msra.mxu0 %v32
    %55 = vmatprep.subr.mxu0 0.0
    %56 = vmatpush1.msra.mxu0 0.0
    %57 = vmatprep.subr.mxu0 0.0
    %58 = vmatpush1.msra.mxu0 0.0
    %59 = vmatprep.subr.mxu0 0.0
    %60 = vmatpush1.msra.mxu0 0.0
    %61 = vmatprep.subr.mxu0 0.0
    %62 = vmatpush1.msra.mxu0 0.0
    %63 = vmatprep.subr.mxu0 0.0
    %64 = vmatpush1.msra.mxu0 0.0
    %65 = vmatprep.subr.mxu0 0.0
    %66 = vmatpush1.msra.mxu0 0.0
    %67 = vmatprep.subr.mxu0 0.0
    %68 = vmatpush1.msra.mxu0 0.0
    %69 = vmatprep.subr.mxu0 0.0
    %70 = vmatpush1.msra.mxu0 0.0
    %71 = vmatprep.subr.mxu0 0.0
    %72 = vmatpush1.msra.mxu0 0.0
    %73 = vmatprep.subr.mxu0 0.0
    %74 = vmatpush1.msra.mxu0 0.0
    %75 = vmatprep.subr.mxu0 0.0
    %76 = vmatpush1.msra.mxu0 0.0
    %77 = vmatprep.subr.mxu0 0.0
    %78 = vmatpush1.msra.mxu0 0.0
    %79 = vmatprep.subr.mxu0 0.0
    %80 = vmatpush1.msra.mxu0 0.0
    %81 = vmatprep.subr.mxu0 0.0
    %82 = vmatpush1.msra.mxu0 0.0
    %83 = vmatprep.subr.mxu0 0.0
    %84 = vmatpush1.msra.mxu0 0.0
    %85 = vmatprep.subr.mxu0 0.0
    %86 = vmatpush1.msra.mxu0 0.0
    %87 = vmatprep.subr.mxu0 0.0
    %88 = vmatpush1.msra.mxu0 0.0
    %89 = vmatprep.subr.mxu0 0.0
    %90 = vmatpush1.msra.mxu0 0.0
    %91 = vmatprep.subr.mxu0 0.0
    %92 = vmatpush1.msra.mxu0 0.0
    %93 = vmatprep.subr.mxu0 0.0
    %94 = vmatpush1.msra.mxu0 0.0
    %95 = vmatprep.subr.mxu0 0.0
    %96 = vmatpush1.msra.mxu0 0.0
    %97 = vmatprep.subr.mxu0 0.0
    %98 = vmatpush1.msra.mxu0 0.0
    %99 = vmatprep.subr.mxu0 0.0
    %100 = vmatpush1.msra.mxu0 0.0
    %101 = vmatprep.subr.mxu0 0.0
    %102 = vmatpush1.msra.mxu0 0.0
    %103 = vmatprep.subr.mxu0 0.0
    %104 = vmatpush1.msra.mxu0 0.0
    %105 = vmatprep.subr.mxu0 0.0
    %106 = vmatpush1.msra.mxu0 0.0
    %107 = vmatprep.subr.mxu0 0.0
    %108 = vmatpush1.msra.mxu0 0.0
    %109 = vmatprep.subr.mxu0 0.0
    %110 = vmatpush1.msra.mxu0 0.0
    %111 = vmatprep.mubr.f32.mxu0 0.0
    %112 = vmatmul.mubr.f32.gmra.mrb[0].mxu0 %v42
    %v113 = vpop.f32.mrb[0].mxu0
    %v114 = vadd.f32 %v38, %v113
    %v115 = vpop.f32.mrb[0].mxu0
    %116 = vmatprep.mubr.f32.mxu0 0.0
    %117 = vmatmul.mubr.f32.gmra.mrb[0].mxu0 %v45
    %v118 = vpop.f32.mrb[0].mxu0
    %v119 = vadd.f32 %v38, %v118
    %v120 = vpop.f32.mrb[0].mxu0
    %121 = vdwg.mxu0
    %v122 = vmul.f32 %v114, 0.5
    %v123 = vmul.f32 %v119, 0.5
    %v124 = vmul.f32 %v114, 0.044715
    %v125 = vmul.f32 %v119, 0.044715
    %v126 = vmul.f32 %v124, %v114
    %v127 = vmul.f32 %v125, %v119
    %v128 = vmul.f32 %v126, %v114
    %v129 = vmul.f32 %v127, %v119
    %v130 = vadd.f32 %v114, %v128
    %v131 = vadd.f32 %v119, %v129
    %v132 = vmul.f32 %v130, 0.7978846
    %v133 = vmul.f32 %v131, 0.7978846
    %v134 = vtanh.pop %v132
    %v135 = vtanh.pop %v133
    %v136 = vadd.f32 %v134, 1.0
    %v137 = vadd.f32 %v135, 1.0
    %v138 = vmul.f32 %v122, %v136
    %v139 = vmul.f32 %v123, %v137
    %v140 = vld [vmem:[%s3] sm:$0xff]
    %v141 = vld [vmem:[%s3 + $0x8] sm:$0xff]
    %v142 = vld [vmem:[%s3 + $0x10] sm:$0xff]
    %v143 = vld [vmem:[%s3 + $0x18] sm:$0xff]
    %v144 = vld [vmem:[%s3 + $0x20] sm:$0xff]
    %v145 = vld [vmem:[%s3 + $0x28] sm:$0xff]
    %v146 = vld [vmem:[%s3 + $0x30] sm:$0xff]
    %v147 = vld [vmem:[%s3 + $0x38] sm:$0xff]
    %vm148 = vcmask 523264
    %v150 = vsel %vm148, %v138, 0
    %v153 = vsel %vm148, %v139, 0
    %155 = vmatprep.subr.mxu0 0.0
    %156 = vmatpush1.msra.mxu0 %v140
    %157 = vmatprep.subr.mxu0 0.0
    %158 = vmatpush1.msra.mxu0 %v141
    %159 = vmatprep.subr.mxu0 0.0
    %160 = vmatpush1.msra.mxu0 %v142
    %161 = vmatprep.subr.mxu0 0.0
    %162 = vmatpush1.msra.mxu0 %v143
    %163 = vmatprep.subr.mxu0 0.0
    %164 = vmatpush1.msra.mxu0 %v144
    %165 = vmatprep.subr.mxu0 0.0
    %166 = vmatpush1.msra.mxu0 %v145
    %167 = vmatprep.subr.mxu0 0.0
    %168 = vmatpush1.msra.mxu0 %v146
    %169 = vmatprep.subr.mxu0 0.0
    %170 = vmatpush1.msra.mxu0 %v147
    %171 = vmatprep.subr.mxu0 0.0
    %172 = vmatpush1.msra.mxu0 0.0
    %173 = vmatprep.subr.mxu0 0.0
    %174 = vmatpush1.msra.mxu0 0.0
    %175 = vmatprep.subr.mxu0 0.0
    %176 = vmatpush1.msra.mxu0 0.0
    %177 = vmatprep.subr.mxu0 0.0
    %178 = vmatpush1.msra.mxu0 0.0
    %179 = vmatprep.subr.mxu0 0.0
    %180 = vmatpush1.msra.mxu0 0.0
    %181 = vmatprep.subr.mxu0 0.0
    %182 = vmatpush1.msra.mxu0 0.0
    %183 = vmatprep.subr.mxu0 0.0
    %184 = vmatpush1.msra.mxu0 0.0
    %185 = vmatprep.subr.mxu0 0.0
    %186 = vmatpush1.msra.mxu0 0.0
    %187 = vmatprep.subr.mxu0 0.0
    %188 = vmatpush1.msra.mxu0 0.0
    %189 = vmatprep.subr.mxu0 0.0
    %190 = vmatpush1.msra.mxu0 0.0
    %191 = vmatprep.subr.mxu0 0.0
    %192 = vmatpush1.msra.mxu0 0.0
    %193 = vmatprep.subr.mxu0 0.0
    %194 = vmatpush1.msra.mxu0 0.0
    %195 = vmatprep.subr.mxu0 0.0
    %196 = vmatpush1.msra.mxu0 0.0
    %197 = vmatprep.subr.mxu0 0.0
    %198 = vmatpush1.msra.mxu0 0.0
    %199 = vmatprep.subr.mxu0 0.0
    %200 = vmatpush1.msra.mxu0 0.0
    %201 = vmatprep.subr.mxu0 0.0
    %202 = vmatpush1.msra.mxu0 0.0
    %203 = vmatprep.subr.mxu0 0.0
    %204 = vmatpush1.msra.mxu0 0.0
    %205 = vmatprep.subr.mxu0 0.0
    %206 = vmatpush1.msra.mxu0 0.0
    %207 = vmatprep.subr.mxu0 0.0
    %208 = vmatpush1.msra.mxu0 0.0
    %209 = vmatprep.subr.mxu0 0.0
    %210 = vmatpush1.msra.mxu0 0.0
    %211 = vmatprep.subr.mxu0 0.0
    %212 = vmatpush1.msra.mxu0 0.0
    %213 = vmatprep.subr.mxu0 0.0
    %214 = vmatpush1.msra.mxu0 0.0
    %215 = vmatprep.subr.mxu0 0.0
    %216 = vmatpush1.msra.mxu0 0.0
    %217 = vmatprep.subr.mxu0 0.0
    %218 = vmatpush1.msra.mxu0 0.0
    %219 = vmatprep.mubr.f32.mxu0 0.0
    %220 = vmatmul.mubr.f32.gmra.mrb[0].mxu0 %v150
    %v221 = vpop.f32.mrb[0].mxu0
    %v222 = vadd.f32 0.0, %v221
    %v223 = vpop.f32.mrb[0].mxu0
    %224 = vmatprep.mubr.f32.mxu0 0.0
    %225 = vmatmul.mubr.f32.gmra.mrb[0].mxu0 %v153
    %v226 = vpop.f32.mrb[0].mxu0
    %v227 = vadd.f32 0.0, %v226
    %v228 = vpop.f32.mrb[0].mxu0
    %229 = vdwg.mxu0
    %v230 = vadd.f32 %v27, %v222
    %v231 = vadd.f32 %v28, %v227
    %v232 = vld [vmem:[%s4] sm:$0x1]
    %v234 = vlaneseq
    %v235 = vshrl.u32 %v234, 7
    %v236 = vsub.s32 0, %v235
    %v237 = vrot.slane %v232, %v236
    %v239 = vadd.f32 %v230, %v237
    %v240 = vadd.f32 %v231, %v237
    %v241 = vsel %vm40, %v239, 0.0
    %242 = vadd.xlane.f32.xlu0 %v241
    %v243 = vpop.xlane.xlu0 %242
    %v244 = vsel %vm40, %v240, 0.0
    %245 = vadd.xlane.f32.xlu0 %v244
    %v246 = vpop.xlane.xlu0 %245
    %v247 = vrcp.pop 32.0
    %v248 = vmul.f32 %v243, %v247
    %v249 = vmul.f32 %v246, %v247
    %v250 = vsub.f32 %v239, %v248
    %v251 = vsub.f32 %v240, %v249
    %v252 = vmul.f32 %v250, %v250
    %v253 = vmul.f32 %v251, %v251
    %v254 = vsel %vm40, %v252, 0.0
    %255 = vadd.xlane.f32.xlu0 %v254
    %v256 = vpop.xlane.xlu0 %255
    %v257 = vsel %vm40, %v253, 0.0
    %258 = vadd.xlane.f32.xlu0 %v257
    %v259 = vpop.xlane.xlu0 %258
    %v260 = vmul.f32 %v256, %v247
    %v261 = vmul.f32 %v259, %v247
    %v262 = vadd.f32 %v260, 1e-05
    %v263 = vadd.f32 %v261, 1e-05
    %v264 = vrsqrt.pop %v262
    %v265 = vrsqrt.pop %v263
    %v266 = vmul.f32 %v250, %v264
    %v267 = vmul.f32 %v251, %v265
    %v268 = vld [vmem:[%s5] sm:$0x1]
    %v270 = vlaneseq
    %v271 = vshrl.u32 %v270, 7
    %v272 = vsub.s32 0, %v271
    %v273 = vrot.slane %v268, %v272
    %v275 = vmul.f32 %v266, %v273
    %v276 = vmul.f32 %v267, %v273
    %v277 = vld [vmem:[%s6] sm:$0x1]
    %v279 = vlaneseq
    %v280 = vshrl.u32 %v279, 7
    %v281 = vsub.s32 0, %v280
    %v282 = vrot.slane %v277, %v281
    %v284 = vadd.f32 %v275, %v282
    %v285 = vadd.f32 %v276, %v282
    %286 = vst.msk [vmem:[#allocation2] sm:$0xff] %vm40, %v284
    %287 = vst.msk [vmem:[#allocation2 + $0x8] sm:$0xff] %vm40, %v285
    // Predicated region
    $region30: #{tpu_custom_call.1} parent=1 // pred_check
      _
    $region31: #{tpu_custom_call.1} parent=1 // pred_check_branch
      %289 = sbr.rel (0) target = $region33
    $region32: #{tpu_custom_call.1} parent=1 // pred_region
      %s291 = ssub.s32 256, 256
      %292 = vsyncadd [#allocation3], %s291
      %s293 = sshll.u32 [#allocation2], 4
      %s294 = int_to_ptr.vmem [resolvable:$true] %s293
      %299 = dma.vmem_to_hbm [thread:$0]  %s294, 256, %s7, [#allocation3], 128, 128, 8
    $region33: #{tpu_custom_call.1} parent=1 // pred_fallthru
      _
    // Predicated region
    $region34: #{tpu_custom_call.1} parent=1 // pred_check
      _
    $region35: #{tpu_custom_call.1} parent=1 // pred_check_branch
      %301 = sbr.rel (0) target = $region37
    $region36: #{tpu_custom_call.1} parent=1 // pred_region
      %302 = dma.done [#allocation3], 256
    $region37: #{tpu_custom_call.1} parent=1 // pred_fallthru
      _
    %303 = vsyncpa [#allocation3], 1

</llo_original>
